<compile_context>
chip_gen: v5e
topology: v5e:2x2
jax: 0.10.0
libtpu: 0.0.40
codegen_flags: <defaults>
</compile_context>

<pallas_src>
import functools

import jax
import jax.numpy as jnp
from jax.experimental import pallas as pl
from jax.experimental.pallas import tpu as pltpu

EPS = 1e-5


def _round_up(v, m):
    return (v + m - 1) // m * m


def _sublane_align(dtype):
    """Channel-tile alignment so packed sub-32-bit layouts stay fully occupied."""
    itemsize = jnp.dtype(dtype).itemsize
    if itemsize >= 4:
        return 8
    if itemsize == 2:
        return 16
    return 32


def _vmem_budget():
    """Generation-aware (per-block byte budget, vmem_limit cap)."""
    cap = 64 << 20  # conservative default (v7x-sized)
    try:
        cap = int(pltpu.get_tpu_info().vmem_capacity_bytes)
    except Exception:
        pass
    if cap >= (100 << 20):          # v5e / v6e: 128 MiB physical VMEM
        return 10 << 20, 96 << 20
    return 5 << 20, 48 << 20        # v7x: 64 MiB per TensorCore


def _stats_affine_kernel(g_ref, b_ref, x_ref, o_ref, *, ct, inv_count):
    """Fused training-mode BatchNorm stats + conditional affine, one pass over x.

    x_ref : (N, Ct, HWp) block - every batch sample of this channel tile, so
            per-channel batch statistics are fully contained in-block.
    g_ref, b_ref : (N, C, 1) full conditional gamma/beta (DMA'd once; constant
            block index), sliced to this channel tile in-kernel.
    o_ref : (N, Ct, HWp) output block (same dtype as x).
    """
    j = pl.program_id(0)
    c0 = pl.multiple_of(j * ct, ct)

    # One-pass per-channel stats with f32 accumulation, reducing straight off
    # the ref (no persistent full-block f32 copy of x). Padded zeros (if any)
    # contribute nothing to either sum; inv_count carries the true count.
    s1 = jnp.sum(x_ref[...], axis=(0, 2), keepdims=True, dtype=jnp.float32)
    s2 = jnp.sum(jnp.square(x_ref[...].astype(jnp.float32)),
                 axis=(0, 2), keepdims=True)
    mean = s1 * inv_count                         # (1, Ct, 1)
    var = s2 * inv_count - mean * mean            # biased variance (training BN)
    inv_std = jax.lax.rsqrt(var + EPS)            # EUP

    gamma = g_ref[:, pl.ds(c0, ct), :].astype(jnp.float32)   # (N, Ct, 1)
    beta = b_ref[:, pl.ds(c0, ct), :].astype(jnp.float32)    # (N, Ct, 1)
    scale = gamma * inv_std                        # (N, Ct, 1)
    shift = beta - mean * scale                    # (N, Ct, 1)

    # Single fused elementwise pass; upcast happens per-vreg here.
    o_ref[...] = (x_ref[...].astype(jnp.float32) * scale + shift).astype(o_ref.dtype)


def _affine_kernel(s_ref, t_ref, x_ref, o_ref, *, ct):
    """Pure elementwise x*scale + shift (stats precomputed), tiled over (C, HW)."""
    i = pl.program_id(0)
    c0 = pl.multiple_of(i * ct, ct)
    scale = s_ref[:, pl.ds(c0, ct), :]            # (N, Ct, 1), already f32
    shift = t_ref[:, pl.ds(c0, ct), :]
    o_ref[...] = (x_ref[...].astype(jnp.float32) * scale + shift).astype(o_ref.dtype)


def multi_conditional_batchnorm2d(x, y, wg, bg, wb, bb):
    """x: (N, C, H, W) NCHW; y: (N, K); wg/wb: (K, C); bg/bb: (C,). Returns (N, C, H, W)."""
    n, c, h, w = x.shape
    hw = h * w
    itemsize = jnp.dtype(x.dtype).itemsize
    x_flat = x.reshape(n, c, hw)

    # Tiny conditional-affine Linears hoisted to XLA (a (N,K)x(K,C) matmul
    # would waste >99% of an MXU tile and be re-run every grid step).
    yf = y.astype(jnp.float32)
    gamma = (yf @ wg.astype(jnp.float32) + bg.astype(jnp.float32)).reshape(n, c, 1)
    beta = (yf @ wb.astype(jnp.float32) + bb.astype(jnp.float32)).reshape(n, c, 1)

    block_budget, vmem_cap = _vmem_budget()
    align = _sublane_align(x.dtype)

    # Lane-dense spatial axis: pad HW up to a multiple of 128.
    hw128 = _round_up(hw, 128)

    # ---- channel tile for the fused (in-block stats) path --------------------
    def work_bytes(ct_):  # conservative f32 working size of one (N, Ct, HWp) block
        return n * ct_ * hw128 * 4

    proper = [t for t in range(align, c, align) if c % t == 0]
    under = [t for t in proper if work_bytes(t) <= block_budget]
    if under:
        ct = max(under)                 # >=2 grid steps keeps both v7x TCs busy
    elif work_bytes(c) <= block_budget:
        ct = c
    elif proper:
        ct = min(proper)
    else:
        ct = c

    blk_in = n * ct * hw128 * itemsize
    blk_f32 = n * ct * hw128 * 4
    # 2x double-buffered input + 2x output + ~2 f32-sized temporaries + slack.
    fused_need = 4 * blk_in + 2 * blk_f32 + (2 << 20)

    if fused_need <= vmem_cap:
        # -------- fused path: ONE HBM read + ONE HBM write of x --------------
        xp = x_flat if hw128 == hw else jnp.pad(
            x_flat, ((0, 0), (0, 0), (0, hw128 - hw)))
        vmem_limit = int(min(vmem_cap, max(16 << 20, fused_need)))
        kernel = functools.partial(_stats_affine_kernel,
                                   ct=ct, inv_count=1.0 / float(n * hw))
        out = pl.pallas_call(
            kernel,
            out_shape=jax.ShapeDtypeStruct((n, c, hw128), x.dtype),
            grid=(c // ct,),
            in_specs=[
                pl.BlockSpec((n, c, 1), lambda j: (0, 0, 0)),       # gamma (once)
                pl.BlockSpec((n, c, 1), lambda j: (0, 0, 0)),       # beta  (once)
                pl.BlockSpec((n, ct, hw128), lambda j: (0, j, 0)),  # x tile
            ],
            out_specs=pl.BlockSpec((n, ct, hw128), lambda j: (0, j, 0)),
            compiler_params=pltpu.CompilerParams(
                dimension_semantics=("parallel",),
                vmem_limit_bytes=vmem_limit,
            ),
        )(gamma, beta, xp)
        if hw128 != hw:
            out = out[:, :, :hw]
        return out.reshape(n, c, h, w)

    # -------- large-HW fallback: precomputed stats + tiled elementwise --------
    # Stats via a cheap XLA reduction (one extra HBM read of x); the Pallas
    # kernel is then a pure scale/shift tiled over (C, HW), so any resolution
    # fits VMEM on every TPU generation.
    mean = jnp.mean(x_flat, axis=(0, 2), keepdims=True, dtype=jnp.float32)
    mean_sq = jnp.mean(jnp.square(x_flat.astype(jnp.float32)),
                       axis=(0, 2), keepdims=True)
    var = mean_sq - jnp.square(mean)
    inv_std = jax.lax.rsqrt(var + EPS)
    scale = (gamma * inv_std).astype(jnp.float32)        # (N, C, 1)
    shift = (beta - mean * scale).astype(jnp.float32)    # (N, C, 1)

    ct_e = min(proper) if proper else c
    lane_row_bytes = n * ct_e * max(itemsize, 4)
    hw_tile = max(128, (block_budget // lane_row_bytes) // 128 * 128)
    hw_tile = min(hw_tile, hw128)
    hwp = _round_up(hw, hw_tile)
    xp = x_flat if hwp == hw else jnp.pad(x_flat, ((0, 0), (0, 0), (0, hwp - hw)))

    blk_in = n * ct_e * hw_tile * itemsize
    blk_f32 = n * ct_e * hw_tile * 4
    vmem_limit = int(min(vmem_cap,
                         max(16 << 20, 4 * blk_in + 2 * blk_f32 + (2 << 20))))

    kernel = functools.partial(_affine_kernel, ct=ct_e)
    out = pl.pallas_call(
        kernel,
        out_shape=jax.ShapeDtypeStruct((n, c, hwp), x.dtype),
        grid=(c // ct_e, hwp // hw_tile),
        in_specs=[
            pl.BlockSpec((n, c, 1), lambda i, j: (0, 0, 0)),         # scale (once)
            pl.BlockSpec((n, c, 1), lambda i, j: (0, 0, 0)),         # shift (once)
            pl.BlockSpec((n, ct_e, hw_tile), lambda i, j: (0, i, j)),
        ],
        out_specs=pl.BlockSpec((n, ct_e, hw_tile), lambda i, j: (0, i, j)),
        compiler_params=pltpu.CompilerParams(
            dimension_semantics=("parallel", "parallel"),
            vmem_limit_bytes=vmem_limit,
        ),
    )(scale, shift, xp)
    if hwp != hw:
        out = out[:, :, :hw]
    return out.reshape(n, c, h, w)


def _reference(x, y, wg, bg, wb, bb):
    """Pure-JAX reference matching the PyTorch forward (training-mode BN, two-pass stats)."""
    xf = x.astype(jnp.float32)
    mean = jnp.mean(xf, axis=(0, 2, 3), keepdims=True)
    var = jnp.mean((xf - mean) ** 2, axis=(0, 2, 3), keepdims=True)
    xhat = (xf - mean) / jnp.sqrt(var + EPS)
    gamma = y.astype(jnp.float32) @ wg + bg
    beta = y.astype(jnp.float32) @ wb + bb
    return gamma[:, :, None, None] * xhat + beta[:, :, None, None]


if __name__ == "__main__":
    key = jax.random.PRNGKey(0)
    k_x, k_y, k_wg, k_bg, k_wb, k_bb = jax.random.split(key, 6)

    N, C, H, W = 2, 4, 16, 16          # batch, num_features, spatial
    K = 8                              # num_classes

    x = jax.random.normal(k_x, (N, C, H, W), dtype=jnp.float32)
    y = jax.random.normal(k_y, (N, K), dtype=jnp.float32)

    # PyTorch Linear params (weight (C, K), bias (C,)), stored pre-transposed
    # as (K, C) so the wrapper does y @ W directly.
    bound = 1.0 / (K ** 0.5)
    wg = jax.random.uniform(k_wg, (K, C), jnp.float32, -bound, bound)
    bg = jax.random.uniform(k_bg, (C,), jnp.float32, -bound, bound)
    wb = jax.random.uniform(k_wb, (K, C), jnp.float32, -bound, bound)
    bb = jax.random.uniform(k_bb, (C,), jnp.float32, -bound, bound)

    out = multi_conditional_batchnorm2d(x, y, wg, bg, wb, bb)
    out = jax.block_until_ready(out)

    ref = _reference(x, y, wg, bg, wb, bb)
    assert out.shape == (N, C, H, W)
    assert jnp.allclose(out, ref, atol=1e-4, rtol=1e-4), "mismatch vs reference"

    print("KERNEL_OK")
</pallas_src>

<mosaic_0001>
module attributes {stable_mosaic.version = 11 : i64} {
  func.func @_stats_affine_kernel(%arg0: i32, %arg1: memref<2x4x1xf32, #tpu.memory_space<vmem>>, %arg2: memref<2x4x1xf32, #tpu.memory_space<vmem>>, %arg3: memref<2x4x256xf32, #tpu.memory_space<vmem>>, %arg4: memref<2x4x256xf32, #tpu.memory_space<vmem>>) attributes {dimension_semantics = [#tpu.dimension_semantics<parallel>], iteration_bounds = array<i64: 1>, scalar_prefetch = 0 : i64, scratch_operands = 0 : i64, tpu.core_type = #tpu.core_type<tc>, window_params = [{pipeline_mode = #tpu.pipeline_mode<synchronous>, transform_indices = @transform_0, window_bounds = array<i64: 2, 4, 1>}, {pipeline_mode = #tpu.pipeline_mode<synchronous>, transform_indices = @transform_1, window_bounds = array<i64: 2, 4, 1>}, {transform_indices = @transform_2, window_bounds = array<i64: 2, 4, 256>}, {transform_indices = @transform_3, window_bounds = array<i64: 2, 4, 256>}]} {
    %c4_i32 = arith.constant 4 : i32
    %0 = arith.muli %arg0, %c4_i32 : i32
    %1 = tpu.assume_multiple %0, 4 : i32
    %c0 = arith.constant 0 : index
    %c0_0 = arith.constant 0 : index
    %c0_1 = arith.constant 0 : index
    %2 = vector.load %arg3[%c0, %c0_0, %c0_1] : memref<2x4x256xf32, #tpu.memory_space<vmem>>, vector<2x4x256xf32>
    %cst = arith.constant dense<0.000000e+00> : vector<4xf32>
    %3 = vector.multi_reduction <add>, %2, %cst [0, 2] : vector<2x4x256xf32> to vector<4xf32>
    %4 = vector.shape_cast %3 : vector<4xf32> to vector<1x4x1xf32>
    %c0_2 = arith.constant 0 : index
    %c0_3 = arith.constant 0 : index
    %c0_4 = arith.constant 0 : index
    %5 = vector.load %arg3[%c0_2, %c0_3, %c0_4] : memref<2x4x256xf32, #tpu.memory_space<vmem>>, vector<2x4x256xf32>
    %6 = arith.mulf %5, %5 : vector<2x4x256xf32>
    %cst_5 = arith.constant dense<0.000000e+00> : vector<4xf32>
    %7 = vector.multi_reduction <add>, %6, %cst_5 [0, 2] : vector<2x4x256xf32> to vector<4xf32>
    %8 = vector.shape_cast %7 : vector<4xf32> to vector<1x4x1xf32>
    %cst_6 = arith.constant 0.001953125 : f32
    %9 = vector.broadcast %cst_6 : f32 to vector<1x4x1xf32>
    %10 = arith.mulf %4, %9 : vector<1x4x1xf32>
    %cst_7 = arith.constant 0.001953125 : f32
    %11 = vector.broadcast %cst_7 : f32 to vector<1x4x1xf32>
    %12 = arith.mulf %8, %11 : vector<1x4x1xf32>
    %13 = arith.mulf %10, %10 : vector<1x4x1xf32>
    %14 = arith.subf %12, %13 : vector<1x4x1xf32>
    %cst_8 = arith.constant 9.99999974E-6 : f32
    %15 = vector.broadcast %cst_8 : f32 to vector<1x4x1xf32>
    %16 = arith.addf %14, %15 : vector<1x4x1xf32>
    %17 = math.rsqrt %16 : vector<1x4x1xf32>
    %c0_9 = arith.constant 0 : index
    %18 = arith.index_cast %1 : i32 to index
    %c0_10 = arith.constant 0 : index
    %19 = vector.load %arg1[%c0_9, %18, %c0_10] : memref<2x4x1xf32, #tpu.memory_space<vmem>>, vector<2x4x1xf32>
    %c0_11 = arith.constant 0 : index
    %20 = arith.index_cast %1 : i32 to index
    %c0_12 = arith.constant 0 : index
    %21 = vector.load %arg2[%c0_11, %20, %c0_12] : memref<2x4x1xf32, #tpu.memory_space<vmem>>, vector<2x4x1xf32>
    %22 = vector.broadcast %17 : vector<1x4x1xf32> to vector<2x4x1xf32>
    %23 = arith.mulf %19, %22 : vector<2x4x1xf32>
    %24 = vector.broadcast %10 : vector<1x4x1xf32> to vector<2x4x1xf32>
    %25 = arith.mulf %24, %23 : vector<2x4x1xf32>
    %26 = arith.subf %21, %25 : vector<2x4x1xf32>
    %c0_13 = arith.constant 0 : index
    %c0_14 = arith.constant 0 : index
    %c0_15 = arith.constant 0 : index
    %27 = vector.load %arg3[%c0_13, %c0_14, %c0_15] : memref<2x4x256xf32, #tpu.memory_space<vmem>>, vector<2x4x256xf32>
    %28 = vector.broadcast %23 : vector<2x4x1xf32> to vector<2x4x256xf32>
    %29 = arith.mulf %27, %28 : vector<2x4x256xf32>
    %30 = vector.broadcast %26 : vector<2x4x1xf32> to vector<2x4x256xf32>
    %31 = arith.addf %29, %30 : vector<2x4x256xf32>
    %c0_16 = arith.constant 0 : index
    %c0_17 = arith.constant 0 : index
    %c0_18 = arith.constant 0 : index
    %32 = vector.load %arg4[%c0_16, %c0_17, %c0_18] : memref<2x4x256xf32, #tpu.memory_space<vmem>>, vector<2x4x256xf32>
    tpu.vector_store %arg4[%c0_16, %c0_17, %c0_18], %31 {strides = array<i32>} : memref<2x4x256xf32, #tpu.memory_space<vmem>>, vector<2x4x256xf32>,
    return
  }
  func.func @transform_0(%arg0: i32) -> (i32, i32, i32) {
    %c0_i32 = arith.constant 0 : i32
    %c0_i32_0 = arith.constant 0 : i32
    %c0_i32_1 = arith.constant 0 : i32
    %c0_i32_2 = arith.constant 0 : i32
    return %c0_i32, %c0_i32_0, %c0_i32_1 : i32, i32, i32
  }
  func.func @transform_1(%arg0: i32) -> (i32, i32, i32) {
    %c0_i32 = arith.constant 0 : i32
    %c0_i32_0 = arith.constant 0 : i32
    %c0_i32_1 = arith.constant 0 : i32
    %c0_i32_2 = arith.constant 0 : i32
    return %c0_i32, %c0_i32_0, %c0_i32_1 : i32, i32, i32
  }
  func.func @transform_2(%arg0: i32) -> (i32, i32, i32) {
    %c0_i32 = arith.constant 0 : i32
    %c0_i32_0 = arith.constant 0 : i32
    %c0_i32_1 = arith.constant 0 : i32
    return %c0_i32, %arg0, %c0_i32_0 : i32, i32, i32
  }
  func.func @transform_3(%arg0: i32) -> (i32, i32, i32) {
    %c0_i32 = arith.constant 0 : i32
    %c0_i32_0 = arith.constant 0 : i32
    %c0_i32_1 = arith.constant 0 : i32
    return %c0_i32, %arg0, %c0_i32_0 : i32, i32, i32
  }
}

</mosaic_0001>

<llo_original>
// kernel: tpu_custom_call.1
$region0: #{tpu_custom_call.1}
  #allocation0 [shape = 'u32[]', space=smem, size = 0x4, offset = 0x4, fixed_abs, tag = 'smem constant byte address 0x4 - core index']
  #allocation1 [shape = 'u32[72,128]{1,0:T(1,128)}', space=vmem, size = 0x9000, scoped, tag = 'internal scratch']
  %s0 = inlined_call_operand.vmem [shape: f32[2,4,1], index: 0, kind: input, shape index: {}]
  %s1 = inlined_call_operand.vmem [shape: f32[2,4,1], index: 1, kind: input, shape index: {}]
  %s2 = inlined_call_operand.vmem [shape: f32[2,4,256], index: 2, kind: input, shape index: {}]
  %s3 = inlined_call_operand.hbm [shape: f32[2,4,256], index: 3, kind: output, shape index: {}]
  %s4 = sld [smem:[#allocation0]]
  $region22: #{tpu_custom_call.1} parent=0
    _
  %s6 = ssub.s32 1, %s4
  %s7 = scalar_select 0, %s6, %s4
  $region1: #{tpu_custom_call.1} parent=0
    #allocation2 [shape = 'u8[8192]{0}', space=vmem, size = 0x2000, scoped, tag = 'output window, operand 0, single buffered']
    #allocation3 [shape = 's32[1]{0}', space=sflag, size = 0x4, scoped, tag = 'scoped memory for tpu_custom_call.1']
    %8 = vsyncpa [#allocation3], 0
    // Predicated region
    $region2: #{tpu_custom_call.1} parent=1 // pred_check
      _
    $region3: #{tpu_custom_call.1} parent=1 // pred_check_branch
      %10 = sbr.rel (0) target = $region5
    $region4: #{tpu_custom_call.1} parent=1 // pred_region
      _
    $region5: #{tpu_custom_call.1} parent=1 // pred_fallthru
      _
    // Predicated region
    $region6: #{tpu_custom_call.1} parent=1 // pred_check
      _
    $region7: #{tpu_custom_call.1} parent=1 // pred_check_branch
      %12 = sbr.rel (0) target = $region9
    $region8: #{tpu_custom_call.1} parent=1 // pred_region
      _
    $region9: #{tpu_custom_call.1} parent=1 // pred_fallthru
      _
    // Predicated region
    $region10: #{tpu_custom_call.1} parent=1 // pred_check
      _
    $region11: #{tpu_custom_call.1} parent=1 // pred_check_branch
      %14 = sbr.rel (0) target = $region13
    $region12: #{tpu_custom_call.1} parent=1 // pred_region
      _
    $region13: #{tpu_custom_call.1} parent=1 // pred_fallthru
      _
    %s15 = smul.u32 0, 4
    %v16 = vld [vmem:[%s2] sm:$0xff]
    %v17 = vld [vmem:[%s2 + $0x8] sm:$0xff]
    %20 = vst [vmem:[#allocation1] ss:$2 sm:$0xff] %v16
    %v21 = vld.sshfl [vmem:[#allocation1] sm:$0xff pattern:$0x75316420]
    %v22 = vld.sshfl [vmem:[#allocation1 + $0x8] sm:$0xff pattern:$0x75316420]
    %s23 = scalar_lea.vmem [#allocation1], 16
    %24 = vst [vmem:[%s23] ss:$2 sm:$0xff] %v17
    %v25 = vld.sshfl [vmem:[#allocation1 + $0x10] sm:$0xff pattern:$0x75316420]
    %v26 = vld.sshfl [vmem:[#allocation1 + $0x18] sm:$0xff pattern:$0x75316420]
    %vm31 = vcmask 1043456
    %v32 = vsel %vm31, %v21, 0.0
    %v33 = vsel %vm31, %v22, 0.0
    %v34 = vadd.f32 %v32, %v33
    %v35 = vsel %vm31, %v25, 0.0
    %v36 = vadd.f32 %v34, %v35
    %v37 = vsel %vm31, %v26, 0.0
    %v38 = vadd.f32 %v36, %v37
    %39 = vadd.xlane.f32.xlu0 %v38
    %v40 = vpop.xlane.xlu0 %39
    %v41 = vmul.f32 %v16, %v16
    %v42 = vmul.f32 %v17, %v17
    %45 = vst [vmem:[#allocation1] ss:$2 sm:$0xff] %v41
    %v46 = vld.sshfl [vmem:[#allocation1] sm:$0xff pattern:$0x75316420]
    %v47 = vld.sshfl [vmem:[#allocation1 + $0x8] sm:$0xff pattern:$0x75316420]
    %s48 = scalar_lea.vmem [#allocation1], 16
    %49 = vst [vmem:[%s48] ss:$2 sm:$0xff] %v42
    %v50 = vld.sshfl [vmem:[#allocation1 + $0x10] sm:$0xff pattern:$0x75316420]
    %v51 = vld.sshfl [vmem:[#allocation1 + $0x18] sm:$0xff pattern:$0x75316420]
    %v56 = vsel %vm31, %v46, 0.0
    %v57 = vsel %vm31, %v47, 0.0
    %v58 = vadd.f32 %v56, %v57
    %v59 = vsel %vm31, %v50, 0.0
    %v60 = vadd.f32 %v58, %v59
    %v61 = vsel %vm31, %v51, 0.0
    %v62 = vadd.f32 %v60, %v61
    %63 = vadd.xlane.f32.xlu0 %v62
    %v64 = vpop.xlane.xlu0 %63
    %v65 = vmul.f32 %v40, 0.001953125
    %v66 = vmul.f32 %v64, 0.001953125
    %v67 = vmul.f32 %v65, %v65
    %v68 = vsub.f32 %v66, %v67
    %v69 = vadd.f32 %v68, 1e-05
    %v70 = vrsqrt.pop %v69
    %v71 = vmul.f32 %v70, %v69
    %v72 = vmul.f32 %v71, %v70
    %v73 = vmul.f32 0.5, %v72
    %v74 = vsub.f32 1.5, %v73
    %v75 = vmul.f32 %v70, %v74
    %vm76 = vweird.f32 %v69
    %vm77 = vweird.f32 %v70
    %vm78 = vmor %vm76, %vm77
    %v79 = vsel %vm78, %v70, %v75
    %s80 = scalar_lea.vmem %s0, %s15
    %v81 = vld [vmem:[%s80] sm:$0xf]
    %v82 = vld [vmem:[%s80 + $0x4] sm:$0xf]
    %s83 = scalar_lea.vmem %s1, %s15
    %v84 = vld [vmem:[%s83] sm:$0xf]
    %v85 = vld [vmem:[%s83 + $0x4] sm:$0xf]
    %v86 = vmul.f32 %v81, %v79
    %v87 = vmul.f32 %v82, %v79
    %v88 = vmul.f32 %v65, %v86
    %v89 = vmul.f32 %v65, %v87
    %v90 = vsub.f32 %v84, %v88
    %v91 = vsub.f32 %v85, %v89
    %93 = vset.pattern.permute.xlu0 0
    %94 = vperm.xlu0 %93, %v86
    %v95 = vpop.permute.xlu0 %94
    %97 = vset.pattern.permute.xlu0 0
    %98 = vperm.xlu0 %97, %v87
    %v99 = vpop.permute.xlu0 %98
    %v101 = vunpack.c.l.s4 839922192
    %v102 = vunpack.c.0.s8 %v101
    %v103 = vperm.slane %v95, %v102
    %v105 = vunpack.c.l.s4 839922192
    %v106 = vunpack.c.0.s8 %v105
    %v107 = vperm.slane %v99, %v106
    %v110 = vmul.f32 %v16, %v103
    %v111 = vmul.f32 %v17, %v107
    %113 = vset.pattern.permute.xlu0 0
    %114 = vperm.xlu0 %113, %v90
    %v115 = vpop.permute.xlu0 %114
    %117 = vset.pattern.permute.xlu0 0
    %118 = vperm.xlu0 %117, %v91
    %v119 = vpop.permute.xlu0 %118
    %v121 = vunpack.c.l.s4 839922192
    %v122 = vunpack.c.0.s8 %v121
    %v123 = vperm.slane %v115, %v122
    %v125 = vunpack.c.l.s4 839922192
    %v126 = vunpack.c.0.s8 %v125
    %v127 = vperm.slane %v119, %v126
    %v130 = vadd.f32 %v110, %v123
    %v131 = vadd.f32 %v111, %v127
    %132 = vst [vmem:[#allocation2] sm:$0xff] %v130
    %133 = vst [vmem:[#allocation2 + $0x8] sm:$0xff] %v131
    // Predicated region
    $region14: #{tpu_custom_call.1} parent=1 // pred_check
      _
    $region15: #{tpu_custom_call.1} parent=1 // pred_check_branch
      %135 = sbr.rel (0) target = $region17
    $region16: #{tpu_custom_call.1} parent=1 // pred_region
      %137 = vsyncadd [#allocation3], 0
      %s138 = sshll.u32 [#allocation2], 4
      %s139 = int_to_ptr.vmem [resolvable:$true] %s138
      %s140 = sshll.u32 %s3, 4
      %s141 = int_to_ptr.hbm [resolvable:$true] %s140
      %146 = dma.vmem_to_hbm [thread:$0]  %s139, 256, %s141, [#allocation3], 128, 128, 8
    $region17: #{tpu_custom_call.1} parent=1 // pred_fallthru
      _
    // Predicated region
    $region18: #{tpu_custom_call.1} parent=1 // pred_check
      _
    $region19: #{tpu_custom_call.1} parent=1 // pred_check_branch
      %148 = sbr.rel (0) target = $region21
    $region20: #{tpu_custom_call.1} parent=1 // pred_region
      %150 = dma.done [#allocation3], 256
    $region21: #{tpu_custom_call.1} parent=1 // pred_fallthru
      _
    %151 = vsyncpa [#allocation3], 1

</llo_original>
